<compile_context>
chip_gen: v7x
topology: tpu7x:2x2x1
jax: 0.10.0
libtpu: 0.0.40
codegen_flags: <defaults>
</compile_context>

<pallas_src>
import numpy as np
import jax
import jax.numpy as jnp
from jax.experimental import pallas as pl
from jax.experimental.pallas import tpu as pltpu


# Fixed enumeration of the (dh, dw) spatial shifts; shared by the trace-time
# weight packing and by the in-kernel row-offset table.
_SHIFTS = tuple((dh, dw) for dh in (-1, 0, 1) for dw in (-1, 0, 1))


def _round_up(v, m):
    return ((v + m - 1) // m) * m


def _cdiv(a, b):
    return -(-a // b)


def _choose_row_tile(rows_per_image, n_images, dpad):
    """Pick (TR, T): TR flattened padded-pixel rows per grid step, T tiles/image."""
    tr = min(1024, _round_up(rows_per_image, 8))   # big tiles amortize step overhead
    t = _cdiv(rows_per_image, tr)
    # v7x megacore: keep >= 4 total grid steps when the problem allows.
    while n_images * t < 4 and tr > max(dpad, 8):
        t += 1
        tr = _round_up(_cdiv(rows_per_image, t), 8)
    tr = _round_up(max(tr, dpad), 8)               # halo must fit inside the next tile
    t = _cdiv(rows_per_image, tr)
    return tr, t


def _pack_weights(params, cin):
    """Pack the three ConvTranspose2d weights into per-shift matrices.

    Returns (w_big (9, Cin, Cpar), bias_row (1, Cpar), ctot, cpar) in f32.
    Output-column layout: (p*2 + q) * Ctot + channel, with channels ordered
    branch2x2, branch3x3, branch5x5 (matches torch.cat(..., dim=1)).
    """
    kernels = (2, 3, 5)
    ctot = sum(w.shape[1] for (w, _) in params)
    cpar = _round_up(4 * ctot, 8)

    per_shift = []
    for dh, dw in _SHIFTS:
        parity_cols = []
        for p in (0, 1):
            for q in (0, 1):
                branch_cols = []
                for k, (w, _) in zip(kernels, params):
                    c = (k - 2) // 2                 # SamePad top/left crop
                    kh = 2 * dh + p + c
                    kw = 2 * dw + q + c
                    cout = w.shape[1]
                    if 0 <= kh < k and 0 <= kw < k:
                        branch_cols.append(w[:, :, kh, kw].astype(jnp.float32))
                    else:
                        branch_cols.append(jnp.zeros((cin, cout), jnp.float32))
                parity_cols.append(jnp.concatenate(branch_cols, axis=1))
        per_shift.append(jnp.concatenate(parity_cols, axis=1))   # (Cin, 4*Ctot)
    w_big = jnp.stack(per_shift, axis=0)                          # (9, Cin, 4*Ctot)

    bias = jnp.concatenate([b.astype(jnp.float32) for (_, b) in params])
    bias_row = jnp.tile(bias, (4,))                               # per-parity copies

    if cpar != 4 * ctot:
        w_big = jnp.pad(w_big, ((0, 0), (0, 0), (0, cpar - 4 * ctot)))
        bias_row = jnp.pad(bias_row, (0, cpar - 4 * ctot))
    return w_big, bias_row.reshape(1, cpar), ctot, cpar


def _make_fused_kernel(tr, dpad, deltas):
    def kernel(x_ref, xnext_ref, w_ref, b_ref, o_ref, xs_ref):
        # Stage this tile's TR rows plus a (2*Wp+2)-row halo from the next
        # tile contiguously in VMEM so every shift is a static row slice.
        xs_ref[0:tr, :] = x_ref[0]
        xs_ref[tr:tr + dpad, :] = xnext_ref[0, 0:dpad, :]

        # 9 shifted matmuls accumulated in f32; DEFAULT precision (K = Cin is
        # tiny, the kernel is HBM-bound on every TPU generation).
        acc = jnp.dot(xs_ref[deltas[0]:deltas[0] + tr, :], w_ref[0],
                      preferred_element_type=jnp.float32)
        for j in range(1, len(deltas)):
            d = deltas[j]
            acc = acc + jnp.dot(xs_ref[d:d + tr, :], w_ref[j],
                                preferred_element_type=jnp.float32)

        # Each output pixel gets exactly one bias add in this formulation, so
        # bias + ReLU fuse cleanly into the kernel (crop already handled by
        # the parity/shift weight packing).  Single lane-contiguous store.
        o_ref[0] = jnp.maximum(acc + b_ref[...], 0.0)
    return kernel


@jax.jit
def transpose_inception_block(x_nchw, params):
    """params = [(w1, b1), (w2, b2), (w3, b3)], w in PyTorch layout (Cin, Cout, k, k)."""
    n, cin, h, w = x_nchw.shape
    hp, wp = h + 2, w + 2                      # 1-pixel zero border = spatial halo
    rows = hp * wp                             # flattened padded pixels per image
    dpad = _round_up(2 * wp + 2, 8)            # max shift offset, rounded to sublanes
    tr, t = _choose_row_tile(rows, n, dpad)

    w_big, bias_row, ctot, cpar = _pack_weights(params, cin)
    deltas = tuple((1 - dh) * wp + (1 - dw) for dh, dw in _SHIFTS)  # all >= 0

    # Flat, zero-bordered input: rows are padded pixels in row-major order.
    x = jnp.transpose(x_nchw, (0, 2, 3, 1)).astype(jnp.float32)     # NCHW -> NHWC
    x = jnp.pad(x, ((0, 0), (1, 1), (1, 1), (0, 0)))
    x = x.reshape(n, rows, cin)
    lead = wp + 1                                # makes every shift offset non-negative
    total_in = (t + 1) * tr                      # one extra tile of zeros for the halo
    x = jnp.pad(x, ((0, 0), (lead, total_in - rows - lead), (0, 0)))

    kernel = _make_fused_kernel(tr, dpad, deltas)
    slab = pl.pallas_call(
        kernel,
        out_shape=jax.ShapeDtypeStruct((n, t * tr, cpar), jnp.float32),
        grid_spec=pltpu.PrefetchScalarGridSpec(
            num_scalar_prefetch=0,
            grid=(n, t),
            in_specs=[
                pl.BlockSpec((1, tr, cin), lambda i, j: (i, j, 0)),
                pl.BlockSpec((1, tr, cin), lambda i, j: (i, j + 1, 0)),  # halo tile
                # Weights/bias < 10 KiB: same block every step -> VMEM-resident.
                pl.BlockSpec((9, cin, cpar), lambda i, j: (0, 0, 0)),
                pl.BlockSpec((1, cpar), lambda i, j: (0, 0)),
            ],
            out_specs=pl.BlockSpec((1, tr, cpar), lambda i, j: (i, j, 0)),
            scratch_shapes=[pltpu.VMEM((tr + dpad, cin), jnp.float32)],
        ),
        compiler_params=pltpu.CompilerParams(
            dimension_semantics=("parallel", "parallel"),  # disjoint output blocks
            vmem_limit_bytes=32 * 1024 * 1024,             # safe on v7x's 64 MiB
        ),
    )(x, x, w_big, bias_row)

    # Single fused XLA pass: drop pad pixels, interleave the 2x2 output
    # parities, and transpose to the module's NCHW contract.
    y = slab[:, :rows, :4 * ctot].reshape(n, hp, wp, 2, 2, ctot)
    y = y[:, 1:h + 1, 1:w + 1]                       # real pixels only
    y = jnp.transpose(y, (0, 5, 1, 3, 2, 4))         # (n, ch, ih, p, iw, q)
    return y.reshape(n, ctot, 2 * h, 2 * w)


# ---------- pure numpy reference (PyTorch semantics) ----------
def _ref_branch(x, w, b, k, s=2):
    # x: (N, Cin, H, W), w: (Cin, Cout, k, k), b: (Cout,)
    N, Cin, H, W = x.shape
    Cout = w.shape[1]
    Ho, Wo = (H - 1) * s + k, (W - 1) * s + k
    out = np.zeros((N, Cout, Ho, Wo), dtype=np.float64)
    for ih in range(H):
        for iw in range(W):
            out[:, :, ih * s:ih * s + k, iw * s:iw * s + k] += np.einsum(
                "nc,cokl->nokl", x[:, :, ih, iw], w)
    out += b[None, :, None, None]
    top = (k - 2) // 2
    bot = (k - 2) - top
    out = out[:, :, top:Ho - bot, top:Wo - bot]
    return np.maximum(out, 0.0)


if __name__ == "__main__":
    N, Cin, H, W = 2, 4, 16, 16
    out1, out2, out3 = 4, 4, 8

    key = jax.random.PRNGKey(0)
    keys = jax.random.split(key, 7)
    x = jax.random.normal(keys[0], (N, Cin, H, W), jnp.float32)

    params = []
    for i, (k, cout) in enumerate(zip((2, 3, 5), (out1, out2, out3))):
        wt = jax.random.normal(keys[1 + 2 * i], (Cin, cout, k, k), jnp.float32) * 0.1
        bt = jax.random.normal(keys[2 + 2 * i], (cout,), jnp.float32) * 0.1
        params.append((wt, bt))

    y = transpose_inception_block(x, params)
    y = jax.block_until_ready(y)

    # reference check (f64); MXU runs bf16 single-pass under DEFAULT precision,
    # so allow ~1e-2-scale absolute slack on O(1) outputs.
    xr = np.asarray(x, dtype=np.float64)
    refs = [
        _ref_branch(xr, np.asarray(w, np.float64), np.asarray(b, np.float64), k)
        for k, (w, b) in zip((2, 3, 5), params)
    ]
    ref = np.concatenate(refs, axis=1)  # (N, out1+out2+out3, 2H, 2W)

    assert y.shape == ref.shape, (y.shape, ref.shape)
    np.testing.assert_allclose(np.asarray(y), ref, rtol=1e-2, atol=2e-2)
    print("KERNEL_OK")
</pallas_src>

<mosaic_0001>
module attributes {stable_mosaic.version = 11 : i64} {
  func.func @kernel(%arg0: i32, %arg1: i32, %arg2: memref<1x168x4xf32, #tpu.memory_space<vmem>>, %arg3: memref<1x168x4xf32, #tpu.memory_space<vmem>>, %arg4: memref<9x4x64xf32, #tpu.memory_space<vmem>>, %arg5: memref<1x64xf32, #tpu.memory_space<vmem>>, %arg6: memref<1x168x64xf32, #tpu.memory_space<vmem>>, %arg7: memref<208x4xf32, #tpu.memory_space<vmem>>) attributes {dimension_semantics = [#tpu.dimension_semantics<parallel>, #tpu.dimension_semantics<parallel>], iteration_bounds = array<i64: 2, 2>, scalar_prefetch = 0 : i64, scratch_operands = 1 : i64, tpu.core_type = #tpu.core_type<tc>, window_params = [{transform_indices = @transform_0, window_bounds = array<i64: 1, 168, 4>}, {transform_indices = @transform_1, window_bounds = array<i64: 1, 168, 4>}, {pipeline_mode = #tpu.pipeline_mode<synchronous>, transform_indices = @transform_2, window_bounds = array<i64: 9, 4, 64>}, {pipeline_mode = #tpu.pipeline_mode<synchronous>, transform_indices = @transform_3, window_bounds = array<i64: 1, 64>}, {transform_indices = @transform_4, window_bounds = array<i64: 1, 168, 64>}]} {
    %c0 = arith.constant 0 : index
    %c0_0 = arith.constant 0 : index
    %c0_1 = arith.constant 0 : index
    %0 = vector.load %arg2[%c0, %c0_0, %c0_1] : memref<1x168x4xf32, #tpu.memory_space<vmem>>, vector<1x168x4xf32>
    %1 = vector.shape_cast %0 : vector<1x168x4xf32> to vector<168x4xf32>
    %c0_2 = arith.constant 0 : index
    %c0_3 = arith.constant 0 : index
    %2 = vector.load %arg7[%c0_2, %c0_3] : memref<208x4xf32, #tpu.memory_space<vmem>>, vector<168x4xf32>
    tpu.vector_store %arg7[%c0_2, %c0_3], %1 {strides = array<i32>} : memref<208x4xf32, #tpu.memory_space<vmem>>, vector<168x4xf32>,
    %c0_4 = arith.constant 0 : index
    %c0_5 = arith.constant 0 : index
    %c0_6 = arith.constant 0 : index
    %3 = vector.load %arg3[%c0_4, %c0_5, %c0_6] : memref<1x168x4xf32, #tpu.memory_space<vmem>>, vector<1x40x4xf32>
    %4 = vector.shape_cast %3 : vector<1x40x4xf32> to vector<40x4xf32>
    %c168 = arith.constant 168 : index
    %c0_7 = arith.constant 0 : index
    %5 = vector.load %arg7[%c168, %c0_7] : memref<208x4xf32, #tpu.memory_space<vmem>>, vector<40x4xf32>
    tpu.vector_store %arg7[%c168, %c0_7], %4 {strides = array<i32>} : memref<208x4xf32, #tpu.memory_space<vmem>>, vector<40x4xf32>,
    %c38 = arith.constant 38 : index
    %c0_8 = arith.constant 0 : index
    %6 = vector.load %arg7[%c38, %c0_8] : memref<208x4xf32, #tpu.memory_space<vmem>>, vector<168x4xf32>
    %c0_9 = arith.constant 0 : index
    %c0_10 = arith.constant 0 : index
    %c0_11 = arith.constant 0 : index
    %7 = vector.load %arg4[%c0_9, %c0_10, %c0_11] : memref<9x4x64xf32, #tpu.memory_space<vmem>>, vector<1x4x64xf32>
    %8 = vector.shape_cast %7 : vector<1x4x64xf32> to vector<4x64xf32>
    %cst = arith.constant dense<0.000000e+00> : vector<168x64xf32>
    %9 = tpu.matmul %6, %8, %cst {dimension_numbers = #tpu.dot_dimension_numbers<[1], [0], [0], [1], [0, 0, 1, 1], [], []>} : vector<168x4xf32>, vector<4x64xf32>, vector<168x64xf32> -> vector<168x64xf32>
    %c37 = arith.constant 37 : index
    %c0_12 = arith.constant 0 : index
    %10 = vector.load %arg7[%c37, %c0_12] : memref<208x4xf32, #tpu.memory_space<vmem>>, vector<168x4xf32>
    %c1 = arith.constant 1 : index
    %c0_13 = arith.constant 0 : index
    %c0_14 = arith.constant 0 : index
    %11 = vector.load %arg4[%c1, %c0_13, %c0_14] : memref<9x4x64xf32, #tpu.memory_space<vmem>>, vector<1x4x64xf32>
    %12 = vector.shape_cast %11 : vector<1x4x64xf32> to vector<4x64xf32>
    %cst_15 = arith.constant dense<0.000000e+00> : vector<168x64xf32>
    %13 = tpu.matmul %10, %12, %cst_15 {dimension_numbers = #tpu.dot_dimension_numbers<[1], [0], [0], [1], [0, 0, 1, 1], [], []>} : vector<168x4xf32>, vector<4x64xf32>, vector<168x64xf32> -> vector<168x64xf32>
    %14 = arith.addf %9, %13 : vector<168x64xf32>
    %c36 = arith.constant 36 : index
    %c0_16 = arith.constant 0 : index
    %15 = vector.load %arg7[%c36, %c0_16] : memref<208x4xf32, #tpu.memory_space<vmem>>, vector<168x4xf32>
    %c2 = arith.constant 2 : index
    %c0_17 = arith.constant 0 : index
    %c0_18 = arith.constant 0 : index
    %16 = vector.load %arg4[%c2, %c0_17, %c0_18] : memref<9x4x64xf32, #tpu.memory_space<vmem>>, vector<1x4x64xf32>
    %17 = vector.shape_cast %16 : vector<1x4x64xf32> to vector<4x64xf32>
    %cst_19 = arith.constant dense<0.000000e+00> : vector<168x64xf32>
    %18 = tpu.matmul %15, %17, %cst_19 {dimension_numbers = #tpu.dot_dimension_numbers<[1], [0], [0], [1], [0, 0, 1, 1], [], []>} : vector<168x4xf32>, vector<4x64xf32>, vector<168x64xf32> -> vector<168x64xf32>
    %19 = arith.addf %14, %18 : vector<168x64xf32>
    %c20 = arith.constant 20 : index
    %c0_20 = arith.constant 0 : index
    %20 = vector.load %arg7[%c20, %c0_20] : memref<208x4xf32, #tpu.memory_space<vmem>>, vector<168x4xf32>
    %c3 = arith.constant 3 : index
    %c0_21 = arith.constant 0 : index
    %c0_22 = arith.constant 0 : index
    %21 = vector.load %arg4[%c3, %c0_21, %c0_22] : memref<9x4x64xf32, #tpu.memory_space<vmem>>, vector<1x4x64xf32>
    %22 = vector.shape_cast %21 : vector<1x4x64xf32> to vector<4x64xf32>
    %cst_23 = arith.constant dense<0.000000e+00> : vector<168x64xf32>
    %23 = tpu.matmul %20, %22, %cst_23 {dimension_numbers = #tpu.dot_dimension_numbers<[1], [0], [0], [1], [0, 0, 1, 1], [], []>} : vector<168x4xf32>, vector<4x64xf32>, vector<168x64xf32> -> vector<168x64xf32>
    %24 = arith.addf %19, %23 : vector<168x64xf32>
    %c19 = arith.constant 19 : index
    %c0_24 = arith.constant 0 : index
    %25 = vector.load %arg7[%c19, %c0_24] : memref<208x4xf32, #tpu.memory_space<vmem>>, vector<168x4xf32>
    %c4 = arith.constant 4 : index
    %c0_25 = arith.constant 0 : index
    %c0_26 = arith.constant 0 : index
    %26 = vector.load %arg4[%c4, %c0_25, %c0_26] : memref<9x4x64xf32, #tpu.memory_space<vmem>>, vector<1x4x64xf32>
    %27 = vector.shape_cast %26 : vector<1x4x64xf32> to vector<4x64xf32>
    %cst_27 = arith.constant dense<0.000000e+00> : vector<168x64xf32>
    %28 = tpu.matmul %25, %27, %cst_27 {dimension_numbers = #tpu.dot_dimension_numbers<[1], [0], [0], [1], [0, 0, 1, 1], [], []>} : vector<168x4xf32>, vector<4x64xf32>, vector<168x64xf32> -> vector<168x64xf32>
    %29 = arith.addf %24, %28 : vector<168x64xf32>
    %c18 = arith.constant 18 : index
    %c0_28 = arith.constant 0 : index
    %30 = vector.load %arg7[%c18, %c0_28] : memref<208x4xf32, #tpu.memory_space<vmem>>, vector<168x4xf32>
    %c5 = arith.constant 5 : index
    %c0_29 = arith.constant 0 : index
    %c0_30 = arith.constant 0 : index
    %31 = vector.load %arg4[%c5, %c0_29, %c0_30] : memref<9x4x64xf32, #tpu.memory_space<vmem>>, vector<1x4x64xf32>
    %32 = vector.shape_cast %31 : vector<1x4x64xf32> to vector<4x64xf32>
    %cst_31 = arith.constant dense<0.000000e+00> : vector<168x64xf32>
    %33 = tpu.matmul %30, %32, %cst_31 {dimension_numbers = #tpu.dot_dimension_numbers<[1], [0], [0], [1], [0, 0, 1, 1], [], []>} : vector<168x4xf32>, vector<4x64xf32>, vector<168x64xf32> -> vector<168x64xf32>
    %34 = arith.addf %29, %33 : vector<168x64xf32>
    %c2_32 = arith.constant 2 : index
    %c0_33 = arith.constant 0 : index
    %35 = vector.load %arg7[%c2_32, %c0_33] : memref<208x4xf32, #tpu.memory_space<vmem>>, vector<168x4xf32>
    %c6 = arith.constant 6 : index
    %c0_34 = arith.constant 0 : index
    %c0_35 = arith.constant 0 : index
    %36 = vector.load %arg4[%c6, %c0_34, %c0_35] : memref<9x4x64xf32, #tpu.memory_space<vmem>>, vector<1x4x64xf32>
    %37 = vector.shape_cast %36 : vector<1x4x64xf32> to vector<4x64xf32>
    %cst_36 = arith.constant dense<0.000000e+00> : vector<168x64xf32>
    %38 = tpu.matmul %35, %37, %cst_36 {dimension_numbers = #tpu.dot_dimension_numbers<[1], [0], [0], [1], [0, 0, 1, 1], [], []>} : vector<168x4xf32>, vector<4x64xf32>, vector<168x64xf32> -> vector<168x64xf32>
    %39 = arith.addf %34, %38 : vector<168x64xf32>
    %c1_37 = arith.constant 1 : index
    %c0_38 = arith.constant 0 : index
    %40 = vector.load %arg7[%c1_37, %c0_38] : memref<208x4xf32, #tpu.memory_space<vmem>>, vector<168x4xf32>
    %c7 = arith.constant 7 : index
    %c0_39 = arith.constant 0 : index
    %c0_40 = arith.constant 0 : index
    %41 = vector.load %arg4[%c7, %c0_39, %c0_40] : memref<9x4x64xf32, #tpu.memory_space<vmem>>, vector<1x4x64xf32>
    %42 = vector.shape_cast %41 : vector<1x4x64xf32> to vector<4x64xf32>
    %cst_41 = arith.constant dense<0.000000e+00> : vector<168x64xf32>
    %43 = tpu.matmul %40, %42, %cst_41 {dimension_numbers = #tpu.dot_dimension_numbers<[1], [0], [0], [1], [0, 0, 1, 1], [], []>} : vector<168x4xf32>, vector<4x64xf32>, vector<168x64xf32> -> vector<168x64xf32>
    %44 = arith.addf %39, %43 : vector<168x64xf32>
    %c0_42 = arith.constant 0 : index
    %c0_43 = arith.constant 0 : index
    %45 = vector.load %arg7[%c0_42, %c0_43] : memref<208x4xf32, #tpu.memory_space<vmem>>, vector<168x4xf32>
    %c8 = arith.constant 8 : index
    %c0_44 = arith.constant 0 : index
    %c0_45 = arith.constant 0 : index
    %46 = vector.load %arg4[%c8, %c0_44, %c0_45] : memref<9x4x64xf32, #tpu.memory_space<vmem>>, vector<1x4x64xf32>
    %47 = vector.shape_cast %46 : vector<1x4x64xf32> to vector<4x64xf32>
    %cst_46 = arith.constant dense<0.000000e+00> : vector<168x64xf32>
    %48 = tpu.matmul %45, %47, %cst_46 {dimension_numbers = #tpu.dot_dimension_numbers<[1], [0], [0], [1], [0, 0, 1, 1], [], []>} : vector<168x4xf32>, vector<4x64xf32>, vector<168x64xf32> -> vector<168x64xf32>
    %49 = arith.addf %44, %48 : vector<168x64xf32>
    %c0_47 = arith.constant 0 : index
    %c0_48 = arith.constant 0 : index
    %50 = vector.load %arg5[%c0_47, %c0_48] : memref<1x64xf32, #tpu.memory_space<vmem>>, vector<1x64xf32>
    %51 = vector.broadcast %50 : vector<1x64xf32> to vector<168x64xf32>
    %52 = arith.addf %49, %51 : vector<168x64xf32>
    %cst_49 = arith.constant 0.000000e+00 : f32
    %53 = vector.broadcast %cst_49 : f32 to vector<168x64xf32>
    %54 = arith.maximumf %52, %53 : vector<168x64xf32>
    %c0_50 = arith.constant 0 : index
    %c0_51 = arith.constant 0 : index
    %c0_52 = arith.constant 0 : index
    %55 = vector.load %arg6[%c0_50, %c0_51, %c0_52] : memref<1x168x64xf32, #tpu.memory_space<vmem>>, vector<1x168x64xf32>
    %56 = vector.shape_cast %55 : vector<1x168x64xf32> to vector<168x64xf32>
    %57 = vector.shape_cast %54 : vector<168x64xf32> to vector<1x168x64xf32>
    tpu.vector_store %arg6[%c0_50, %c0_51, %c0_52], %57 {strides = array<i32>} : memref<1x168x64xf32, #tpu.memory_space<vmem>>, vector<1x168x64xf32>,
    return
  }
  func.func @transform_0(%arg0: i32, %arg1: i32) -> (i32, i32, i32) {
    %c0_i32 = arith.constant 0 : i32
    %c0_i32_0 = arith.constant 0 : i32
    return %arg0, %arg1, %c0_i32 : i32, i32, i32
  }
  func.func @transform_1(%arg0: i32, %arg1: i32) -> (i32, i32, i32) {
    %c1_i32 = arith.constant 1 : i32
    %0 = arith.addi %arg1, %c1_i32 : i32
    %c0_i32 = arith.constant 0 : i32
    %c0_i32_0 = arith.constant 0 : i32
    return %arg0, %0, %c0_i32 : i32, i32, i32
  }
  func.func @transform_2(%arg0: i32, %arg1: i32) -> (i32, i32, i32) {
    %c0_i32 = arith.constant 0 : i32
    %c0_i32_0 = arith.constant 0 : i32
    %c0_i32_1 = arith.constant 0 : i32
    %c0_i32_2 = arith.constant 0 : i32
    return %c0_i32, %c0_i32_0, %c0_i32_1 : i32, i32, i32
  }
  func.func @transform_3(%arg0: i32, %arg1: i32) -> (i32, i32) {
    %c0_i32 = arith.constant 0 : i32
    %c0_i32_0 = arith.constant 0 : i32
    %c0_i32_1 = arith.constant 0 : i32
    return %c0_i32, %c0_i32_0 : i32, i32
  }
  func.func @transform_4(%arg0: i32, %arg1: i32) -> (i32, i32, i32) {
    %c0_i32 = arith.constant 0 : i32
    %c0_i32_0 = arith.constant 0 : i32
    return %arg0, %arg1, %c0_i32 : i32, i32, i32
  }
}

</mosaic_0001>

<llo_original>
// kernel: tile.9
$region0: #{tile.9}
  %s0 = inlined_call_operand.vmem [shape: f32[4,16], index: 0, kind: input, shape index: {}]
  %s1 = inlined_call_operand.vmem [shape: f32[1,64], index: 1, kind: output, shape index: {}]
  $region1: #{tile.9} parent=0
    #allocation0 [shape = 'u8[4096]{0}', space=vmem, size = 0x1000, scoped, tag = 'scoped mem for output reshape']
    #allocation1 [shape = 'u8[4096]{0}', space=vmem, size = 0x1000, scoped, tag = 'scoped mem for input reshape']
    %s3 = sshllo.u32 0, 4
    %v4 = vld [vmem:[%s0] sm:%s3]
    %5 = vst [vmem:[#allocation1] sm:%s3] %v4
    %v6 = vld [vmem:[#allocation1] sm:$0x1]
    %vm7 = vcmask 130048
    %8 = vst.msk [vmem:[#allocation0] sm:$0x1] %vm7, %v6
    %s9 = scalar_lea.vmem [#allocation1], 3
    %v10 = vld [vmem:[%s9] sm:$0x1]
    %11 = vrot.lane.b32.xlu0 %v10, 48
    %v12 = vpop.permute.xlu0 %11
    %vm13 = vcmask 523648
    %14 = vst.msk [vmem:[#allocation0] sm:$0x1] %vm13, %v12
    %s15 = scalar_lea.vmem [#allocation1], 2
    %v16 = vld [vmem:[%s15] sm:$0x1]
    %17 = vrot.lane.b32.xlu0 %v16, 32
    %v18 = vpop.permute.xlu0 %17
    %vm19 = vcmask 392448
    %20 = vst.msk [vmem:[#allocation0] sm:$0x1] %vm19, %v18
    %s21 = scalar_lea.vmem [#allocation1], 1
    %v22 = vld [vmem:[%s21] sm:$0x1]
    %23 = vrot.lane.b32.xlu0 %v22, 16
    %v24 = vpop.permute.xlu0 %23
    %vm25 = vcmask 261248
    %26 = vst.msk [vmem:[#allocation0] sm:$0x1] %vm25, %v24
    %s28 = sshllo.u32 0, 1
    %v30 = vld [vmem:[#allocation0] sm:%s28]
    %s31 = sshllo.u32 0, 1
    %32 = vst [vmem:[%s1] sm:%s31] %v30

// kernel: tile.8
$region0: #{tile.8}
  #allocation0 [shape = 's32[1]{0}', space=sflag, size = 0x4, scoped, tag = 'scoped memory for tile.8']
  %s0 = inlined_call_operand.vmem [shape: f32[16], index: 0, kind: input, shape index: {}]
  %s1 = inlined_call_operand.vmem [shape: f32[4,16], index: 1, kind: output, shape index: {}]
  // Predicated region
  $region2: #{tile.8} parent=0 // pred_check
    _
  $region3: #{tile.8} parent=0 // pred_check_branch
    %3 = sbr.rel (0) target = $region5
  $region4: #{tile.8} parent=0 // pred_region
    _
  $region5: #{tile.8} parent=0 // pred_fallthru
    _
  %v4 = vld [vmem:[%s0] ss:$0 sm:$0xff]
  %5 = vst [vmem:[%s1] sm:$0xf] %v4

</llo_original>
